<compile_context>
chip_gen: v6e
topology: v6e:2x2x1
jax: 0.10.0
libtpu: 0.0.40
codegen_flags: <defaults>
</compile_context>

<pallas_src>
import functools

import jax
import jax.numpy as jnp
from jax.experimental import pallas as pl
from jax.experimental.pallas import tpu as pltpu


def _round_up(x, m):
    return ((x + m - 1) // m) * m


def classifier_kernel(x_ref, w_ref, b_ref, o_ref, *, n_factors):
    # Linear: logits = x @ W_pad + b_pad  (MXU matmul, f32 accumulate).
    # W is lane-padded to 128 with zero columns and the bias pad lanes hold -1e30,
    # so padded lanes never win the max and exp(pad - max) underflows to 0.
    logits = jnp.dot(x_ref[...], w_ref[...], preferred_element_type=jnp.float32)
    logits = logits + b_ref[...]  # b_ref is (1, NF_PAD); broadcasts over the batch tile

    # Numerically stable log_softmax over the factor axis. All reductions are
    # per-row, so any garbage rows in a ragged tail block stay in those rows
    # (and their stores are masked off by Pallas) — do not "fix" with a mask.
    m = jnp.max(logits, axis=1, keepdims=True)
    z = logits - m
    s = jnp.sum(jnp.exp(z), axis=1, keepdims=True)  # exp/log run on the EUP slot
    lse = jnp.log(s)

    # Store ONLY the real factor lanes. This kernel is HBM/overhead bound, so
    # writing n_factors lanes (one whole-tile masked store) beats a 128-lane
    # padded store + an XLA slice by a wide margin.
    o_ref[...] = (z - lse)[:, :n_factors].astype(o_ref.dtype)


def _classifier_forward(x, w, b, *, batch_tile=4096):
    """log_softmax(x @ w + b, axis=1).

    x: (B, n_latents) f32
    w: (n_latents, n_factors) f32   (transposed vs torch's (out, in))
    b: (n_factors,) f32
    """
    B, n_latents = x.shape
    n_factors = w.shape[1]

    # Internal lane padding of W/b only (tiny, fused inside this jit).
    # The OUTPUT is NOT padded, so no padded lanes ever hit HBM.
    nf_pad = _round_up(max(n_factors, 128), 128)
    w_p = jnp.pad(w, ((0, 0), (0, nf_pad - n_factors)))               # zero cols
    b_p = jnp.pad(b, (0, nf_pad - n_factors), constant_values=-1e30)  # -inf-ish (f32)
    b_p = b_p.reshape(1, nf_pad)

    # Batch tile: big enough to amortize per-step pipeline overhead, small enough
    # that the grid has >= 2 steps when possible so both v7x TensorCores get work.
    if B < 8:
        tb = B  # block second-to-last dim must be 8-aligned OR equal the full dim
    else:
        tb = min(batch_tile, _round_up(pl.cdiv(B, 2), 8))
        tb = max(tb, 8)
    grid = (pl.cdiv(B, tb),)  # ragged tail handled by Pallas; no wrapper x pad

    # NOTE: n_latents (K) is tiny here, so W stays fully resident and the MXU is
    # nowhere near the bottleneck at K=10. Only if K grows to hundreds+ should a
    # trailing "arbitrary" K grid axis + f32 VMEM accumulator be added.
    cost = pl.CostEstimate(
        flops=2 * B * n_latents * n_factors,
        transcendentals=B * (n_factors + 1),  # exp per real lane + log per row
        bytes_accessed=(x.size + w.size + b.size + B * n_factors) * 4,
    )

    out = pl.pallas_call(
        functools.partial(classifier_kernel, n_factors=n_factors),
        out_shape=jax.ShapeDtypeStruct((B, n_factors), jnp.float32),
        grid_spec=pltpu.PrefetchScalarGridSpec(
            num_scalar_prefetch=0,
            grid=grid,
            in_specs=[
                pl.BlockSpec((tb, n_latents), lambda i: (i, 0)),      # x tile
                pl.BlockSpec((n_latents, nf_pad), lambda i: (0, 0)),  # W resident
                pl.BlockSpec((1, nf_pad), lambda i: (0, 0)),          # b resident
            ],
            out_specs=pl.BlockSpec((tb, n_factors), lambda i: (i, 0)),
        ),
        compiler_params=pltpu.CompilerParams(
            dimension_semantics=("parallel",),   # megacore-shardable batch axis
            vmem_limit_bytes=32 * 1024 * 1024,   # comfortably under v7x's 64 MiB
        ),
        cost_estimate=cost,
    )(x, w_p, b_p)

    return out


# Single dispatch per call: jit fuses the tiny W/b pads with the pallas_call.
classifier_forward = jax.jit(_classifier_forward, static_argnames=("batch_tile",))


def init_params(key, n_latents=10, n_factors=5):
    # Deterministic init mimicking nn.Linear.reset_parameters:
    # uniform(-1/sqrt(fan_in), 1/sqrt(fan_in)) for both weight and bias.
    kw, kb = jax.random.split(key)
    bound = 1.0 / (n_latents ** 0.5)
    w = jax.random.uniform(kw, (n_latents, n_factors), jnp.float32, -bound, bound)
    b = jax.random.uniform(kb, (n_factors,), jnp.float32, -bound, bound)
    return w, b


if __name__ == "__main__":
    n_latents, n_factors, batch = 10, 5, 8
    key = jax.random.PRNGKey(0)
    kx, kp = jax.random.split(key)
    x = jax.random.normal(kx, (batch, n_latents), jnp.float32)
    w, b = init_params(kp, n_latents, n_factors)

    out = classifier_forward(x, w, b)
    out = jax.block_until_ready(out)

    # Reference check in plain JAX (same math as torch F.log_softmax(fc(x), dim=1)).
    ref = jax.nn.log_softmax(x @ w + b, axis=1)
    assert out.shape == (batch, n_factors)
    assert jnp.allclose(out, ref, atol=1e-5, rtol=1e-5)

    # Also exercise real tiling + ragged tail handling (B not a multiple of tb).
    big_B = 1000
    xb = jax.random.normal(jax.random.PRNGKey(1), (big_B, n_latents), jnp.float32)
    out_b = jax.block_until_ready(classifier_forward(xb, w, b))
    ref_b = jax.nn.log_softmax(xb @ w + b, axis=1)
    assert out_b.shape == (big_B, n_factors)
    assert jnp.allclose(out_b, ref_b, atol=1e-5, rtol=1e-5)

    print("KERNEL_OK")
</pallas_src>

<mosaic_0001>
module attributes {stable_mosaic.version = 11 : i64} {
  func.func @classifier_kernel(%arg0: i32, %arg1: memref<8x10xf32, #tpu.memory_space<vmem>>, %arg2: memref<10x128xf32, #tpu.memory_space<vmem>>, %arg3: memref<1x128xf32, #tpu.memory_space<vmem>>, %arg4: memref<8x5xf32, #tpu.memory_space<vmem>>) attributes {dimension_semantics = [#tpu.dimension_semantics<parallel>], iteration_bounds = array<i64: 1>, scalar_prefetch = 0 : i64, scratch_operands = 0 : i64, tpu.core_type = #tpu.core_type<tc>, window_params = [{transform_indices = @transform_0, window_bounds = array<i64: 8, 10>}, {pipeline_mode = #tpu.pipeline_mode<synchronous>, transform_indices = @transform_1, window_bounds = array<i64: 10, 128>}, {pipeline_mode = #tpu.pipeline_mode<synchronous>, transform_indices = @transform_2, window_bounds = array<i64: 1, 128>}, {transform_indices = @transform_3, window_bounds = array<i64: 8, 5>}]} {
    %c0 = arith.constant 0 : index
    %c0_0 = arith.constant 0 : index
    %0 = vector.load %arg1[%c0, %c0_0] : memref<8x10xf32, #tpu.memory_space<vmem>>, vector<8x10xf32>
    %c0_1 = arith.constant 0 : index
    %c0_2 = arith.constant 0 : index
    %1 = vector.load %arg2[%c0_1, %c0_2] : memref<10x128xf32, #tpu.memory_space<vmem>>, vector<10x128xf32>
    %cst = arith.constant dense<0.000000e+00> : vector<8x128xf32>
    %2 = tpu.matmul %0, %1, %cst {dimension_numbers = #tpu.dot_dimension_numbers<[1], [0], [0], [1], [0, 0, 1, 1], [], []>} : vector<8x10xf32>, vector<10x128xf32>, vector<8x128xf32> -> vector<8x128xf32>
    %c0_3 = arith.constant 0 : index
    %c0_4 = arith.constant 0 : index
    %3 = vector.load %arg3[%c0_3, %c0_4] : memref<1x128xf32, #tpu.memory_space<vmem>>, vector<1x128xf32>
    %4 = vector.broadcast %3 : vector<1x128xf32> to vector<8x128xf32>
    %5 = arith.addf %2, %4 : vector<8x128xf32>
    %cst_5 = arith.constant dense<0xFF800000> : vector<8xf32>
    %6 = vector.multi_reduction <maximumf>, %5, %cst_5 [1] : vector<8x128xf32> to vector<8xf32>
    %7 = vector.shape_cast %6 : vector<8xf32> to vector<8x1xf32>
    %8 = vector.broadcast %7 : vector<8x1xf32> to vector<8x128xf32>
    %9 = arith.subf %5, %8 : vector<8x128xf32>
    %10 = math.exp %9 : vector<8x128xf32>
    %cst_6 = arith.constant dense<0.000000e+00> : vector<8xf32>
    %11 = vector.multi_reduction <add>, %10, %cst_6 [1] : vector<8x128xf32> to vector<8xf32>
    %12 = vector.shape_cast %11 : vector<8xf32> to vector<8x1xf32>
    %13 = math.log %12 : vector<8x1xf32>
    %14 = vector.broadcast %13 : vector<8x1xf32> to vector<8x128xf32>
    %15 = arith.subf %9, %14 : vector<8x128xf32>
    %16 = vector.extract_strided_slice %15 {offsets = [0, 0], sizes = [8, 5], strides = [1, 1]} : vector<8x128xf32> to vector<8x5xf32>
    %c0_7 = arith.constant 0 : index
    %c0_8 = arith.constant 0 : index
    %17 = vector.load %arg4[%c0_7, %c0_8] : memref<8x5xf32, #tpu.memory_space<vmem>>, vector<8x5xf32>
    tpu.vector_store %arg4[%c0_7, %c0_8], %16 {strides = array<i32>} : memref<8x5xf32, #tpu.memory_space<vmem>>, vector<8x5xf32>,
    return
  }
  func.func @transform_0(%arg0: i32) -> (i32, i32) {
    %c0_i32 = arith.constant 0 : i32
    %c0_i32_0 = arith.constant 0 : i32
    return %arg0, %c0_i32 : i32, i32
  }
  func.func @transform_1(%arg0: i32) -> (i32, i32) {
    %c0_i32 = arith.constant 0 : i32
    %c0_i32_0 = arith.constant 0 : i32
    %c0_i32_1 = arith.constant 0 : i32
    return %c0_i32, %c0_i32_0 : i32, i32
  }
  func.func @transform_2(%arg0: i32) -> (i32, i32) {
    %c0_i32 = arith.constant 0 : i32
    %c0_i32_0 = arith.constant 0 : i32
    %c0_i32_1 = arith.constant 0 : i32
    return %c0_i32, %c0_i32_0 : i32, i32
  }
  func.func @transform_3(%arg0: i32) -> (i32, i32) {
    %c0_i32 = arith.constant 0 : i32
    %c0_i32_0 = arith.constant 0 : i32
    return %arg0, %c0_i32 : i32, i32
  }
}

</mosaic_0001>

<llo_original>
// kernel: _classifier_forward.1
$region0: #{_classifier_forward.1}
  #allocation0 [shape = 'u32[]', space=smem, size = 0x4, offset = 0x4, fixed_abs, tag = 'smem constant byte address 0x4 - core index']
  #allocation1 [shape = 'u32[144,128]{1,0:T(1,128)}', space=vmem, size = 0x12000, scoped, tag = 'internal scratch']
  %s0 = inlined_call_operand.vmem [shape: f32[8,10], index: 0, kind: input, shape index: {}]
  %s1 = inlined_call_operand.vmem [shape: f32[10,128], index: 1, kind: input, shape index: {}]
  %s2 = inlined_call_operand.vmem [shape: f32[1,128], index: 2, kind: input, shape index: {}]
  %s3 = inlined_call_operand.hbm [shape: f32[8,5], index: 3, kind: output, shape index: {}]
  %s4 = sld [smem:[#allocation0]]
  $region22: #{_classifier_forward.1} parent=0
    _
  %s6 = ssub.s32 1, %s4
  %s7 = scalar_select 0, %s6, %s4
  $region1: #{_classifier_forward.1} parent=0
    #allocation2 [shape = 'u8[4096]{0}', space=vmem, size = 0x1000, scoped, tag = 'output window, operand 0, single buffered']
    #allocation3 [shape = 's32[1]{0}', space=sflag, size = 0x4, scoped, tag = 'scoped memory for _classifier_forward.1']
    %8 = vsyncpa [#allocation3], 0
    // Predicated region
    $region2: #{_classifier_forward.1} parent=1 // pred_check
      _
    $region3: #{_classifier_forward.1} parent=1 // pred_check_branch
      %10 = sbr.rel (0) target = $region5
    $region4: #{_classifier_forward.1} parent=1 // pred_region
      _
    $region5: #{_classifier_forward.1} parent=1 // pred_fallthru
      _
    // Predicated region
    $region6: #{_classifier_forward.1} parent=1 // pred_check
      _
    $region7: #{_classifier_forward.1} parent=1 // pred_check_branch
      %12 = sbr.rel (0) target = $region9
    $region8: #{_classifier_forward.1} parent=1 // pred_region
      _
    $region9: #{_classifier_forward.1} parent=1 // pred_fallthru
      _
    // Predicated region
    $region10: #{_classifier_forward.1} parent=1 // pred_check
      _
    $region11: #{_classifier_forward.1} parent=1 // pred_check_branch
      %14 = sbr.rel (0) target = $region13
    $region12: #{_classifier_forward.1} parent=1 // pred_region
      _
    $region13: #{_classifier_forward.1} parent=1 // pred_fallthru
      _
    %v15 = vld [vmem:[%s0] sm:$0xff]
    %v16 = vld [vmem:[%s1] sm:$0xff]
    %v17 = vld [vmem:[%s1 + $0x8] sm:$0x3]
    %v18 = vld [vmem:[%s2] sm:$0x1]
    %v20 = vlaneseq
    %v21 = vshrl.u32 %v20, 7
    %v22 = vsub.s32 0, %v21
    %v23 = vrot.slane %v18, %v22
    %vm25 = vcmask 80896
    %v27 = vsel %vm25, %v15, 0
    %vm29 = vcmask 1041408
    %v31 = vsel %vm29, %v17, 0
    %33 = vmatprep.subr.mxu0 0.0
    %34 = vmatpush1.msra.mxu0 0.0
    %35 = vmatprep.subr.mxu0 0.0
    %36 = vmatpush1.msra.mxu0 0.0
    %37 = vmatprep.subr.mxu0 0.0
    %38 = vmatpush1.msra.mxu0 0.0
    %39 = vmatprep.subr.mxu0 0.0
    %40 = vmatpush1.msra.mxu0 0.0
    %41 = vmatprep.subr.mxu0 0.0
    %42 = vmatpush1.msra.mxu0 0.0
    %43 = vmatprep.subr.mxu0 0.0
    %44 = vmatpush1.msra.mxu0 0.0
    %45 = vmatprep.subr.mxu0 0.0
    %46 = vmatpush1.msra.mxu0 0.0
    %47 = vmatprep.subr.mxu0 0.0
    %48 = vmatpush1.msra.mxu0 0.0
    %49 = vmatprep.subr.mxu0 0.0
    %50 = vmatpush1.msra.mxu0 0.0
    %51 = vmatprep.subr.mxu0 0.0
    %52 = vmatpush1.msra.mxu0 0.0
    %53 = vmatprep.subr.mxu0 0.0
    %54 = vmatpush1.msra.mxu0 0.0
    %55 = vmatprep.subr.mxu0 0.0
    %56 = vmatpush1.msra.mxu0 0.0
    %57 = vmatprep.subr.mxu0 0.0
    %58 = vmatpush1.msra.mxu0 0.0
    %59 = vmatprep.subr.mxu0 0.0
    %60 = vmatpush1.msra.mxu0 0.0
    %61 = vmatprep.subr.mxu0 0.0
    %62 = vmatpush1.msra.mxu0 %v31
    %63 = vmatprep.subr.mxu0 0.0
    %64 = vmatpush1.msra.mxu0 %v16
    %65 = vmatprep.subr.mxu0 0.0
    %66 = vmatpush2.msra.mxu0 0.0
    %67 = vmatprep.subr.mxu0 0.0
    %68 = vmatpush2.msra.mxu0 0.0
    %69 = vmatprep.subr.mxu0 0.0
    %70 = vmatpush2.msra.mxu0 0.0
    %71 = vmatprep.subr.mxu0 0.0
    %72 = vmatpush2.msra.mxu0 0.0
    %73 = vmatprep.subr.mxu0 0.0
    %74 = vmatpush2.msra.mxu0 0.0
    %75 = vmatprep.subr.mxu0 0.0
    %76 = vmatpush2.msra.mxu0 0.0
    %77 = vmatprep.subr.mxu0 0.0
    %78 = vmatpush2.msra.mxu0 0.0
    %79 = vmatprep.subr.mxu0 0.0
    %80 = vmatpush2.msra.mxu0 0.0
    %81 = vmatprep.subr.mxu0 0.0
    %82 = vmatpush2.msra.mxu0 0.0
    %83 = vmatprep.subr.mxu0 0.0
    %84 = vmatpush2.msra.mxu0 0.0
    %85 = vmatprep.subr.mxu0 0.0
    %86 = vmatpush2.msra.mxu0 0.0
    %87 = vmatprep.subr.mxu0 0.0
    %88 = vmatpush2.msra.mxu0 0.0
    %89 = vmatprep.subr.mxu0 0.0
    %90 = vmatpush2.msra.mxu0 0.0
    %91 = vmatprep.subr.mxu0 0.0
    %92 = vmatpush2.msra.mxu0 0.0
    %93 = vmatprep.subr.mxu0 0.0
    %94 = vmatpush2.msra.mxu0 0.0
    %95 = vmatprep.subr.mxu0 0.0
    %96 = vmatpush2.msra.mxu0 0.0
    %97 = vmatprep.mubr.f32.mxu0 0.0
    %98 = vmatmul.mubr.f32.gmra.mxu0 %v27
    %v99 = vpop.f32.mrf.mxu0
    %v100 = vadd.f32 %v23, %v99
    %v101 = vpop.f32.mrf.mxu0
    %102 = vdwg.mxu0
    %103 = vmax.xlane.f32.xlu0 %v100
    %v104 = vpop.xlane.xlu0 %103
    %v105 = vsub.f32 %v100, %v104
    %v106 = vmul.f32 %v105, 1.442695
    %v107 = vpow.pop %v106
    %108 = vadd.xlane.f32.xlu0 %v107
    %v109 = vpop.xlane.xlu0 %108
    %v110 = vlog2.pop %v109
    %v111 = vmul.f32 %v110, 0.6931472
    %v112 = vsub.f32 %v105, %v111
    %vm113 = vcmask 39936
    %114 = vst.msk [vmem:[#allocation2] sm:$0xff] %vm113, %v112
    // Predicated region
    $region14: #{_classifier_forward.1} parent=1 // pred_check
      _
    $region15: #{_classifier_forward.1} parent=1 // pred_check_branch
      %116 = sbr.rel (0) target = $region17
    $region16: #{_classifier_forward.1} parent=1 // pred_region
      %s118 = ssub.s32 128, 128
      %119 = vsyncadd [#allocation3], %s118
      %s121 = sshll.u32 [#allocation2], 4
      %s122 = int_to_ptr.vmem [resolvable:$true] %s121
      %124 = dma.vmem_to_hbm [thread:$0]  %s122, 128, %s3, [#allocation3]
    $region17: #{_classifier_forward.1} parent=1 // pred_fallthru
      _
    // Predicated region
    $region18: #{_classifier_forward.1} parent=1 // pred_check
      _
    $region19: #{_classifier_forward.1} parent=1 // pred_check_branch
      %126 = sbr.rel (0) target = $region21
    $region20: #{_classifier_forward.1} parent=1 // pred_region
      %127 = dma.done [#allocation3], 128
    $region21: #{_classifier_forward.1} parent=1 // pred_fallthru
      _
    %128 = vsyncpa [#allocation3], 1

</llo_original>
